<compile_context>
chip_gen: v5e
topology: v5e:2x2
jax: 0.10.0
libtpu: 0.0.40
codegen_flags: <defaults>
</compile_context>

<pallas_src>
import jax
import jax.numpy as jnp
from jax.experimental import pallas as pl
from jax.experimental.pallas import tpu as pltpu


# ---------------------------------------------------------------------------
# Kernel
# ---------------------------------------------------------------------------
def _exact_ode_kernel(t_ref, y_ref, w_ref, b_ref, wdiag_ref, dy_ref, logdet_ref):
    """One (TILE_B, Dp) batch tile.

    t_ref      : SMEM (1,)          scalar time (f32)
    y_ref      : VMEM (TILE_B, Dp)  state tile (MXU dtype: f32 or bf16)
    w_ref      : VMEM (Dp, Dp)      weight, VMEM-resident (MXU dtype)
    b_ref      : VMEM (1, Dp)       time bias (f32)
    wdiag_ref  : VMEM (1, Dp)       diag(W) (f32, zero-padded)
    dy_ref     : VMEM (TILE_B, Dp)  output dy/dt (original y dtype)
    logdet_ref : VMEM (TILE_B, 1)   output exact Jacobian trace (f32)
    """
    t = t_ref[0]
    # MXU: (TILE_B, Dp) x (Dp, Dp) with f32 accumulation.
    z = jnp.dot(y_ref[...], w_ref[...], preferred_element_type=jnp.float32)
    z = z + t * b_ref[...]                       # broadcast (1, Dp) -> (TILE_B, Dp), f32
    dy = jnp.tanh(z)                             # EUP, f32
    dy_ref[...] = dy.astype(dy_ref.dtype)
    # Exact Jacobian diagonal: d(dy_i)/d(y_i) = (1 - tanh^2(z_i)) * W[i, i]
    jac_diag = (1.0 - dy * dy) * wdiag_ref[...]  # VPU, f32
    logdet_ref[...] = jnp.sum(jac_diag, axis=-1, keepdims=True)  # XLU reduce, f32 out


# ---------------------------------------------------------------------------
# Wrapper / tiling helpers
# ---------------------------------------------------------------------------
_MAX_TILE_B = 512            # max rows per grid step (multiple of 8 sublanes)
_TILE_VMEM_BUDGET = 32 << 20  # budget for the double-buffered y/dy tiles


def _round_up(x, m):
    return ((x + m - 1) // m) * m


def _cdiv(a, b):
    return -(-a // b)


def _choose_batch_tiling(batch, d_pad, y_itemsize, dy_itemsize):
    """Pick (tile_b, padded_batch) so the last tile has minimal padding waste
    and the double-buffered in/out tiles fit the VMEM budget."""
    b8 = _round_up(max(batch, 1), 8)
    per_row = d_pad * 2 * (y_itemsize + dy_itemsize)   # 2x: double-buffered
    cap = max(8, (_TILE_VMEM_BUDGET // max(per_row, 1)) // 8 * 8)
    max_tile = max(8, min(_MAX_TILE_B, cap))
    num_tiles = _cdiv(b8, max_tile)
    tile_b = min(max_tile, _round_up(_cdiv(batch, num_tiles), 8))
    return tile_b, tile_b * num_tiles


def _vmem_limit_bytes(tile_b, d_pad, w_itemsize, y_itemsize, dy_itemsize):
    w_bytes = 2 * d_pad * d_pad * w_itemsize        # resident weight (count 2 buffers)
    y_bytes = 2 * tile_b * d_pad * y_itemsize       # double-buffered input tiles
    dy_bytes = 2 * tile_b * d_pad * dy_itemsize     # double-buffered output tiles
    small = 2 * (2 * d_pad * 4) + 2 * tile_b * 4    # b, diag(W), log-det tiles
    budget = w_bytes + y_bytes + dy_bytes + small + (2 << 20)
    return int(min(max(budget, 4 << 20), 110 << 20))


@jax.jit
def _exact_ode_forward(t, y, w_p, b_p, wdiag_p):
    """Jitted forward: returns (dy [B, D] in y.dtype, log_det [B, 1] f32)."""
    B, D = y.shape
    Dp = w_p.shape[0]
    y_itemsize = jnp.dtype(w_p.dtype).itemsize
    dy_itemsize = jnp.dtype(y.dtype).itemsize
    tile_b, Bp = _choose_batch_tiling(B, Dp, y_itemsize, dy_itemsize)

    y_p = y
    if (Bp, Dp) != (B, D):
        y_p = jnp.pad(y, ((0, Bp - B), (0, Dp - D)))
    y_mxu = y_p.astype(w_p.dtype)                 # bf16 or f32 MXU operands
    t_arr = jnp.asarray(t, jnp.float32).reshape(1)

    vmem_limit = _vmem_limit_bytes(
        tile_b, Dp, jnp.dtype(w_p.dtype).itemsize, y_itemsize, dy_itemsize)
    # TODO(synk): for very large event_size (f32 W beyond ~2.8k on v7x's 64 MiB
    # VMEM) the resident-weight pattern no longer fits; a K/N tiling grid axis
    # with a VMEM f32 accumulator would be needed.

    dy_p, ld_p = pl.pallas_call(
        _exact_ode_kernel,
        grid=(Bp // tile_b,),
        out_shape=(
            jax.ShapeDtypeStruct((Bp, Dp), y.dtype),      # dy
            jax.ShapeDtypeStruct((Bp, 1), jnp.float32),   # log_det (always f32)
        ),
        in_specs=[
            pl.BlockSpec(memory_space=pltpu.SMEM),               # t (whole array in SMEM)
            pl.BlockSpec((tile_b, Dp), lambda i: (i, 0)),        # y tile, streamed
            pl.BlockSpec((Dp, Dp), lambda i: (0, 0)),            # W, VMEM-resident
            pl.BlockSpec((1, Dp), lambda i: (0, 0)),             # b, VMEM-resident
            pl.BlockSpec((1, Dp), lambda i: (0, 0)),             # diag(W), VMEM-resident
        ],
        out_specs=(
            pl.BlockSpec((tile_b, Dp), lambda i: (i, 0)),        # dy tile, streamed
            pl.BlockSpec((tile_b, 1), lambda i: (i, 0)),         # log_det tile
        ),
        compiler_params=pltpu.CompilerParams(
            dimension_semantics=("parallel",),   # shard batch grid across v7x's 2 TCs
            vmem_limit_bytes=vmem_limit,
        ),
    )(t_arr, y_mxu, w_p, b_p, wdiag_p)

    return dy_p[:B, :D], ld_p[:B]


# ---------------------------------------------------------------------------
# Module mirror
# ---------------------------------------------------------------------------
class ExactODEFunctionPallas:
    """JAX/Pallas mirror of torchflows ExactODEFunction with a concrete
    tanh-linear TimeDerivative whose log-det is computed exactly.

    mxu_dtype=jnp.bfloat16 engages the fast bf16 MXU path and halves HBM
    traffic for the streamed y tiles (recommended on v6e/v7x); elementwise
    math and the log-det stay float32 in all cases.
    """

    def __init__(self, event_size: int, dtype=jnp.float32, seed: int = 0,
                 mxu_dtype=jnp.float32, check_finite: bool = False):
        key = jax.random.PRNGKey(seed)
        kw, kb = jax.random.split(key)
        # deterministic parameter init (synthetic; no checkpoint load)
        self.W = (jax.random.normal(kw, (event_size, event_size), dtype)
                  * (1.0 / jnp.sqrt(event_size)))
        self.b = jax.random.normal(kb, (1, event_size), dtype) * 0.1
        self._n_evals = 0.0  # mirrors the registered buffer
        self.check_finite = check_finite  # debug only: forces host sync per eval

        # Hoisted per-call work: pad event dim to a lane multiple, precompute
        # diag(W), and pre-cast the MXU operand once.
        D = event_size
        Dp = max(128, _round_up(D, 128))
        pad = Dp - D
        w_f32 = self.W.astype(jnp.float32)
        self._W_p = jnp.pad(w_f32, ((0, pad), (0, pad))).astype(mxu_dtype)
        self._b_p = jnp.pad(self.b.astype(jnp.float32), ((0, 0), (0, pad)))
        self._wdiag_p = jnp.pad(jnp.diag(w_f32).reshape(1, -1), ((0, 0), (0, pad)))

    def before_odeint(self, **kwargs):
        self._n_evals = 0.0

    def regularization(self):
        return jnp.zeros((), dtype=jnp.float32)

    def forward(self, t, states):
        assert len(states) >= 2
        y = states[0]
        self._n_evals += 1.0
        # TODO(synk): torch.enable_grad()/requires_grad_ bookkeeping has no
        # forward-pass equivalent in JAX (grads are taken functionally).
        t_arr = jnp.asarray(t, jnp.float32)
        dy, log_det = _exact_ode_forward(t_arr, y, self._W_p, self._b_p, self._wdiag_p)
        if self.check_finite:
            # Debug-only: a device->host sync every ODE RHS evaluation.
            assert bool(jnp.all(jnp.isfinite(log_det)))
        extra_zeros = [jnp.zeros_like(s_) for s_ in states[2:]]
        return tuple([dy, log_det] + extra_zeros)

    __call__ = forward


# ---------------------------------------------------------------------------
# Demo / self-check
# ---------------------------------------------------------------------------
if __name__ == "__main__":
    B, D = 2, 32  # batch_size, event_size
    key = jax.random.PRNGKey(0)
    ky, ke = jax.random.split(key)
    y0 = jax.random.normal(ky, (B, D), jnp.float32)
    log_det0 = jnp.zeros((B, 1), jnp.float32)            # states[1]: log-det accumulator
    extra = jax.random.normal(ke, (B, D), jnp.float32)   # an extra state s_
    t = jnp.float32(0.5)

    # Plain-JAX reference.
    fn = ExactODEFunctionPallas(event_size=D, seed=0)          # f32 MXU path
    z_ref = y0 @ fn.W + t * fn.b
    dy_ref = jnp.tanh(z_ref)
    ld_ref = jnp.sum((1.0 - dy_ref ** 2) * jnp.diag(fn.W)[None, :], axis=-1, keepdims=True)

    # f32 path: tight check.
    fn.before_odeint()
    outs = jax.block_until_ready(fn(t, (y0, log_det0, extra)))
    assert outs[0].shape == (B, D) and outs[1].shape == (B, 1) and outs[2].shape == (B, D)
    assert jnp.allclose(outs[0], dy_ref, atol=1e-5)
    assert jnp.allclose(outs[1], ld_ref, atol=1e-5)
    assert jnp.all(outs[2] == 0)

    # bf16 MXU operand path (v6e/v7x fast path): loose check.
    fn16 = ExactODEFunctionPallas(event_size=D, seed=0, mxu_dtype=jnp.bfloat16)
    outs16 = jax.block_until_ready(fn16(t, (y0, log_det0, extra)))
    assert outs16[1].dtype == jnp.float32              # log-det stays f32
    assert jnp.allclose(outs16[0], dy_ref, atol=5e-2)
    assert jnp.allclose(outs16[1], ld_ref, atol=5e-2)

    # Larger batch: exercises the multi-tile batch grid + low-waste tile pick.
    B2 = 300
    y1 = jax.random.normal(jax.random.PRNGKey(1), (B2, D), jnp.float32)
    outs2 = jax.block_until_ready(fn(t, (y1, jnp.zeros((B2, 1), jnp.float32))))
    z2 = y1 @ fn.W + t * fn.b
    dy2 = jnp.tanh(z2)
    ld2 = jnp.sum((1.0 - dy2 ** 2) * jnp.diag(fn.W)[None, :], axis=-1, keepdims=True)
    assert outs2[0].shape == (B2, D) and outs2[1].shape == (B2, 1)
    assert jnp.allclose(outs2[0], dy2, atol=1e-5)
    assert jnp.allclose(outs2[1], ld2, atol=1e-5)

    print("KERNEL_OK")
</pallas_src>

<mosaic_0001>
module attributes {stable_mosaic.version = 11 : i64} {
  func.func @_exact_ode_kernel(%arg0: i32, %arg1: memref<1xf32, #tpu.memory_space<smem>>, %arg2: memref<8x128xf32, #tpu.memory_space<vmem>>, %arg3: memref<128x128xf32, #tpu.memory_space<vmem>>, %arg4: memref<1x128xf32, #tpu.memory_space<vmem>>, %arg5: memref<1x128xf32, #tpu.memory_space<vmem>>, %arg6: memref<8x128xf32, #tpu.memory_space<vmem>>, %arg7: memref<8x1xf32, #tpu.memory_space<vmem>>) attributes {dimension_semantics = [#tpu.dimension_semantics<parallel>], iteration_bounds = array<i64: 1>, scalar_prefetch = 0 : i64, scratch_operands = 0 : i64, tpu.core_type = #tpu.core_type<tc>, window_params = [{transform_indices = @transform_0, window_bounds = array<i64: 1>}, {transform_indices = @transform_1, window_bounds = array<i64: 8, 128>}, {pipeline_mode = #tpu.pipeline_mode<synchronous>, transform_indices = @transform_2, window_bounds = array<i64: 128, 128>}, {pipeline_mode = #tpu.pipeline_mode<synchronous>, transform_indices = @transform_3, window_bounds = array<i64: 1, 128>}, {pipeline_mode = #tpu.pipeline_mode<synchronous>, transform_indices = @transform_4, window_bounds = array<i64: 1, 128>}, {transform_indices = @transform_5, window_bounds = array<i64: 8, 128>}, {transform_indices = @transform_6, window_bounds = array<i64: 8, 1>}]} {
    %c0 = arith.constant 0 : index
    %0 = memref.load %arg1[%c0] : memref<1xf32, #tpu.memory_space<smem>>
    %c0_0 = arith.constant 0 : index
    %c0_1 = arith.constant 0 : index
    %1 = vector.load %arg2[%c0_0, %c0_1] : memref<8x128xf32, #tpu.memory_space<vmem>>, vector<8x128xf32>
    %c0_2 = arith.constant 0 : index
    %c0_3 = arith.constant 0 : index
    %2 = vector.load %arg3[%c0_2, %c0_3] : memref<128x128xf32, #tpu.memory_space<vmem>>, vector<128x128xf32>
    %cst = arith.constant dense<0.000000e+00> : vector<8x128xf32>
    %3 = tpu.matmul %1, %2, %cst {dimension_numbers = #tpu.dot_dimension_numbers<[1], [0], [0], [1], [0, 0, 1, 1], [], []>} : vector<8x128xf32>, vector<128x128xf32>, vector<8x128xf32> -> vector<8x128xf32>
    %c0_4 = arith.constant 0 : index
    %c0_5 = arith.constant 0 : index
    %4 = vector.load %arg4[%c0_4, %c0_5] : memref<1x128xf32, #tpu.memory_space<vmem>>, vector<1x128xf32>
    %5 = vector.broadcast %0 : f32 to vector<1x128xf32>
    %6 = arith.mulf %5, %4 : vector<1x128xf32>
    %7 = vector.broadcast %6 : vector<1x128xf32> to vector<8x128xf32>
    %8 = arith.addf %3, %7 : vector<8x128xf32>
    %9 = math.tanh %8 : vector<8x128xf32>
    %c0_6 = arith.constant 0 : index
    %c0_7 = arith.constant 0 : index
    %10 = vector.load %arg6[%c0_6, %c0_7] : memref<8x128xf32, #tpu.memory_space<vmem>>, vector<8x128xf32>
    tpu.vector_store %arg6[%c0_6, %c0_7], %9 {strides = array<i32>} : memref<8x128xf32, #tpu.memory_space<vmem>>, vector<8x128xf32>,
    %11 = arith.mulf %9, %9 : vector<8x128xf32>
    %cst_8 = arith.constant 1.000000e+00 : f32
    %12 = vector.broadcast %cst_8 : f32 to vector<8x128xf32>
    %13 = arith.subf %12, %11 : vector<8x128xf32>
    %c0_9 = arith.constant 0 : index
    %c0_10 = arith.constant 0 : index
    %14 = vector.load %arg5[%c0_9, %c0_10] : memref<1x128xf32, #tpu.memory_space<vmem>>, vector<1x128xf32>
    %15 = vector.broadcast %14 : vector<1x128xf32> to vector<8x128xf32>
    %16 = arith.mulf %13, %15 : vector<8x128xf32>
    %cst_11 = arith.constant dense<0.000000e+00> : vector<8xf32>
    %17 = vector.multi_reduction <add>, %16, %cst_11 [1] : vector<8x128xf32> to vector<8xf32>
    %18 = vector.shape_cast %17 : vector<8xf32> to vector<8x1xf32>
    %c0_12 = arith.constant 0 : index
    %c0_13 = arith.constant 0 : index
    %19 = vector.load %arg7[%c0_12, %c0_13] : memref<8x1xf32, #tpu.memory_space<vmem>>, vector<8x1xf32>
    tpu.vector_store %arg7[%c0_12, %c0_13], %18 {strides = array<i32>} : memref<8x1xf32, #tpu.memory_space<vmem>>, vector<8x1xf32>,
    return
  }
  func.func @transform_0(%arg0: i32) -> i32 {
    %c0_i32 = arith.constant 0 : i32
    %c0_i32_0 = arith.constant 0 : i32
    return %c0_i32 : i32
  }
  func.func @transform_1(%arg0: i32) -> (i32, i32) {
    %c0_i32 = arith.constant 0 : i32
    %c0_i32_0 = arith.constant 0 : i32
    return %arg0, %c0_i32 : i32, i32
  }
  func.func @transform_2(%arg0: i32) -> (i32, i32) {
    %c0_i32 = arith.constant 0 : i32
    %c0_i32_0 = arith.constant 0 : i32
    %c0_i32_1 = arith.constant 0 : i32
    return %c0_i32, %c0_i32_0 : i32, i32
  }
  func.func @transform_3(%arg0: i32) -> (i32, i32) {
    %c0_i32 = arith.constant 0 : i32
    %c0_i32_0 = arith.constant 0 : i32
    %c0_i32_1 = arith.constant 0 : i32
    return %c0_i32, %c0_i32_0 : i32, i32
  }
  func.func @transform_4(%arg0: i32) -> (i32, i32) {
    %c0_i32 = arith.constant 0 : i32
    %c0_i32_0 = arith.constant 0 : i32
    %c0_i32_1 = arith.constant 0 : i32
    return %c0_i32, %c0_i32_0 : i32, i32
  }
  func.func @transform_5(%arg0: i32) -> (i32, i32) {
    %c0_i32 = arith.constant 0 : i32
    %c0_i32_0 = arith.constant 0 : i32
    return %arg0, %c0_i32 : i32, i32
  }
  func.func @transform_6(%arg0: i32) -> (i32, i32) {
    %c0_i32 = arith.constant 0 : i32
    %c0_i32_0 = arith.constant 0 : i32
    return %arg0, %c0_i32 : i32, i32
  }
}

</mosaic_0001>

<llo_original>
// kernel: _exact_ode_forward.1
$region0: #{_exact_ode_forward.1}
  #allocation0 [shape = 'u32[]', space=smem, size = 0x4, offset = 0x4, fixed_abs, tag = 'smem constant byte address 0x4 - core index']
  #allocation1 [shape = 'u32[72,128]{1,0:T(1,128)}', space=vmem, size = 0x9000, scoped, tag = 'internal scratch']
  #allocation2 [shape = 'f32[1]{0:T(128)S(6)}', space=smem, size = 0x200, scoped, tag = 'scoped memory for _exact_ode_forward.1']
  %s0 = inlined_call_operand.<no memory space> [shape: f32[1], index: 0, kind: input, shape index: {}]
  %s1 = inlined_call_operand.vmem [shape: f32[8,128], index: 1, kind: input, shape index: {}]
  %s2 = inlined_call_operand.hbm [shape: f32[128,128], index: 2, kind: input, shape index: {}]
  %s3 = inlined_call_operand.vmem [shape: f32[1,128], index: 3, kind: input, shape index: {}]
  %s4 = inlined_call_operand.vmem [shape: f32[1,128], index: 4, kind: input, shape index: {}]
  %s5 = inlined_call_operand.vmem [shape: f32[8,128], index: 5, kind: output, shape index: {0}]
  %s6 = inlined_call_operand.vmem [shape: f32[8,1], index: 6, kind: output, shape index: {1}]
  %7 = xla_tuple %s5, %s6
  %s8 = sld [smem:[#allocation0]]
  $region42: #{_exact_ode_forward.1} parent=0
    _
  %s10 = ssub.s32 1, %s8
  %s11 = scalar_select 0, %s10, %s8
  %12 = sst [smem:[#allocation2]] %s0
  $region1: #{_exact_ode_forward.1} parent=0
    #allocation3 [shape = 'u8[65536]{0}', space=vmem, size = 0x10000, scoped, tag = 'input window, operand 2, single buffered']
    #allocation4 [shape = 's32[1]{0}', space=sflag, size = 0x4, scoped, tag = 'scoped memory for _exact_ode_forward.1']
    %13 = vsyncpa [#allocation4], 0
    // Predicated region
    $region2: #{_exact_ode_forward.1} parent=1 // pred_check
      _
    $region3: #{_exact_ode_forward.1} parent=1 // pred_check_branch
      %15 = sbr.rel (0) target = $region5
    $region4: #{_exact_ode_forward.1} parent=1 // pred_region
      _
    $region5: #{_exact_ode_forward.1} parent=1 // pred_fallthru
      _
    // Predicated region
    $region6: #{_exact_ode_forward.1} parent=1 // pred_check
      _
    $region7: #{_exact_ode_forward.1} parent=1 // pred_check_branch
      %17 = sbr.rel (0) target = $region9
    $region8: #{_exact_ode_forward.1} parent=1 // pred_region
      _
    $region9: #{_exact_ode_forward.1} parent=1 // pred_fallthru
      _
    // Predicated region
    $region10: #{_exact_ode_forward.1} parent=1 // pred_check
      _
    $region11: #{_exact_ode_forward.1} parent=1 // pred_check_branch
      %19 = sbr.rel (0) target = $region13
    $region12: #{_exact_ode_forward.1} parent=1 // pred_region
      %21 = vsyncadd [#allocation4], 0
      %s22 = sshll.u32 %s2, 4
      %s23 = int_to_ptr.hbm [resolvable:$true] %s22
      %s24 = sshll.u32 [#allocation3], 4
      %s25 = int_to_ptr.vmem [resolvable:$true] %s24
      %30 = dma.hbm_to_vmem [thread:$0]  %s23, 2048, %s25, [#allocation4], 128, 128, 8
    $region13: #{_exact_ode_forward.1} parent=1 // pred_fallthru
      _
    // Predicated region
    $region14: #{_exact_ode_forward.1} parent=1 // pred_check
      _
    $region15: #{_exact_ode_forward.1} parent=1 // pred_check_branch
      %32 = sbr.rel (0) target = $region17
    $region16: #{_exact_ode_forward.1} parent=1 // pred_region
      _
    $region17: #{_exact_ode_forward.1} parent=1 // pred_fallthru
      _
    // Predicated region
    $region18: #{_exact_ode_forward.1} parent=1 // pred_check
      _
    $region19: #{_exact_ode_forward.1} parent=1 // pred_check_branch
      %34 = sbr.rel (0) target = $region21
    $region20: #{_exact_ode_forward.1} parent=1 // pred_region
      _
    $region21: #{_exact_ode_forward.1} parent=1 // pred_fallthru
      _
    // Predicated region
    $region22: #{_exact_ode_forward.1} parent=1 // pred_check
      _
    $region23: #{_exact_ode_forward.1} parent=1 // pred_check_branch
      %36 = sbr.rel (0) target = $region25
    $region24: #{_exact_ode_forward.1} parent=1 // pred_region
      %38 = dma.done [#allocation4], 2048
    $region25: #{_exact_ode_forward.1} parent=1 // pred_fallthru
      _
    %s39 = sld [smem:[#allocation2]]
    %v40 = vld [vmem:[%s1] sm:$0xff]
    %v41 = vld [vmem:[#allocation3] sm:$0xff]
    %v42 = vld [vmem:[#allocation3 + $0x8] sm:$0xff]
    %v43 = vld [vmem:[#allocation3 + $0x10] sm:$0xff]
    %v44 = vld [vmem:[#allocation3 + $0x18] sm:$0xff]
    %v45 = vld [vmem:[#allocation3 + $0x20] sm:$0xff]
    %v46 = vld [vmem:[#allocation3 + $0x28] sm:$0xff]
    %v47 = vld [vmem:[#allocation3 + $0x30] sm:$0xff]
    %v48 = vld [vmem:[#allocation3 + $0x38] sm:$0xff]
    %v49 = vld [vmem:[#allocation3 + $0x40] sm:$0xff]
    %v50 = vld [vmem:[#allocation3 + $0x48] sm:$0xff]
    %v51 = vld [vmem:[#allocation3 + $0x50] sm:$0xff]
    %v52 = vld [vmem:[#allocation3 + $0x58] sm:$0xff]
    %v53 = vld [vmem:[#allocation3 + $0x60] sm:$0xff]
    %v54 = vld [vmem:[#allocation3 + $0x68] sm:$0xff]
    %v55 = vld [vmem:[#allocation3 + $0x70] sm:$0xff]
    %v56 = vld [vmem:[#allocation3 + $0x78] sm:$0xff]
    %v57 = vld [vmem:[%s3] sm:$0x1]
    %v58 = vstv %s39
    %v59 = vmul.f32 %v58, %v57
    %v61 = vperm.slane %v59, 0
    %63 = vmatpush.msra.mxu0 %v56
    %64 = vmatpush.msra.mxu0 %v55
    %65 = vmatpush.msra.mxu0 %v54
    %66 = vmatpush.msra.mxu0 %v53
    %67 = vmatpush.msra.mxu0 %v52
    %68 = vmatpush.msra.mxu0 %v51
    %69 = vmatpush.msra.mxu0 %v50
    %70 = vmatpush.msra.mxu0 %v49
    %71 = vmatpush.msra.mxu0 %v48
    %72 = vmatpush.msra.mxu0 %v47
    %73 = vmatpush.msra.mxu0 %v46
    %74 = vmatpush.msra.mxu0 %v45
    %75 = vmatpush.msra.mxu0 %v44
    %76 = vmatpush.msra.mxu0 %v43
    %77 = vmatpush.msra.mxu0 %v42
    %78 = vmatpush.msra.mxu0 %v41
    %79 = vmatmul.f32.gmra.mxu0 %v40
    %v80 = vpop.f32.mrf.mxu0
    %v81 = vadd.f32 %v61, %v80
    %82 = vdwg.mxu0
    %v83 = vtanh.pop %v81
    %84 = vst [vmem:[%s5] sm:$0xff] %v83
    %v85 = vmul.f32 %v83, %v83
    %v86 = vsub.f32 1.0, %v85
    %v87 = vld [vmem:[%s4] sm:$0x1]
    %v89 = vperm.slane %v87, 0
    %v91 = vmul.f32 %v86, %v89
    %92 = vadd.xlane.f32.xlu0 %v91
    %v93 = vpop.xlane.xlu0 %92
    %vm94 = vcmask 7168
    %95 = vst.msk [vmem:[%s6] sm:$0xff] %vm94, %v93
    // Predicated region
    $region26: #{_exact_ode_forward.1} parent=1 // pred_check
      _
    $region27: #{_exact_ode_forward.1} parent=1 // pred_check_branch
      %97 = sbr.rel (0) target = $region29
    $region28: #{_exact_ode_forward.1} parent=1 // pred_region
      _
    $region29: #{_exact_ode_forward.1} parent=1 // pred_fallthru
      _
    // Predicated region
    $region30: #{_exact_ode_forward.1} parent=1 // pred_check
      _
    $region31: #{_exact_ode_forward.1} parent=1 // pred_check_branch
      %99 = sbr.rel (0) target = $region33
    $region32: #{_exact_ode_forward.1} parent=1 // pred_region
      _
    $region33: #{_exact_ode_forward.1} parent=1 // pred_fallthru
      _
    // Predicated region
    $region34: #{_exact_ode_forward.1} parent=1 // pred_check
      _
    $region35: #{_exact_ode_forward.1} parent=1 // pred_check_branch
      %101 = sbr.rel (0) target = $region37
    $region36: #{_exact_ode_forward.1} parent=1 // pred_region
      _
    $region37: #{_exact_ode_forward.1} parent=1 // pred_fallthru
      _
    // Predicated region
    $region38: #{_exact_ode_forward.1} parent=1 // pred_check
      _
    $region39: #{_exact_ode_forward.1} parent=1 // pred_check_branch
      %103 = sbr.rel (0) target = $region41
    $region40: #{_exact_ode_forward.1} parent=1 // pred_region
      _
    $region41: #{_exact_ode_forward.1} parent=1 // pred_fallthru
      _
    %104 = vsyncpa [#allocation4], 1

</llo_original>
